<compile_context>
chip_gen: v7x
topology: tpu7x:2x2x1
jax: 0.10.0
libtpu: 0.0.40
codegen_flags: <defaults>
</compile_context>

<pallas_src>
import jax
import jax.numpy as jnp
from jax.experimental import pallas as pl
from jax.experimental.pallas import tpu as pltpu


def _copy_kernel(x_ref, o_ref):
    # Lane-dense copy of one (tm, L) tile; stores are full-width vst.
    o_ref[...] = x_ref[...]


def _choose_slab(bs: int, n: int) -> tuple[int, int]:
    """Pick a flat lane-dense (R, L) factorisation of bs*n, if one exists."""
    total = bs * n
    for lanes in (4096, 2048, 1024, 512, 256, 128):
        if total % lanes == 0:
            return total // lanes, lanes
    # Tiny / awkward sizes: keep the natural shape; last block dim == full n
    # keeps the (8,128) rule satisfied (block dim equals the array dim).
    return bs, n


def restructure(x: jax.Array, *, target_block_bytes: int = 8 * 1024 * 1024) -> jax.Array:
    bs, n = x.shape
    assert n % 4 == 0, "feature dim must be divisible by 4"
    itemsize = jnp.dtype(x.dtype).itemsize
    total = bs * n

    # ---- flat lane-dense slab ------------------------------------------------
    R, L = _choose_slab(bs, n)
    slab = x.reshape(R, L)  # contiguous row-major: metadata-only, bit-exact

    # ---- exact, dtype-aware row-tile sizing ----------------------------------
    sub = max(8, 32 // itemsize)                         # 8 f32 / 16 bf16 / 32 int8
    rows_budget = max(1, target_block_bytes // (L * itemsize))
    tm = max(sub, (rows_budget // sub) * sub)            # multiple of sublane count
    tm = min(tm, R)                                      # never exceed the slab
    # Give v7x's two TensorCores something to split: force >= 2 grid steps
    # whenever there are at least two full sublane groups of rows.
    if pl.cdiv(R, tm) < 2 and R >= 2 * sub:
        tm = max(sub, ((R // 2) // sub) * sub)

    num_steps = pl.cdiv(R, tm)
    block_bytes = tm * L * itemsize
    grid = (num_steps,)

    # Small blocks with many steps: deepen the input pipeline to hide DMA latency.
    if block_bytes < 2 * 1024 * 1024 and num_steps >= 3:
        in_spec = pl.BlockSpec((tm, L), lambda i: (i, 0), pipeline_mode=pl.Buffered(3))
    else:
        in_spec = pl.BlockSpec((tm, L), lambda i: (i, 0))

    flat = pl.pallas_call(
        _copy_kernel,
        out_shape=jax.ShapeDtypeStruct((R, L), x.dtype),
        grid=grid,
        in_specs=[in_spec],
        out_specs=pl.BlockSpec((tm, L), lambda i: (i, 0)),
        # Output aliases the input buffer: no new HBM allocation; copy-free
        # when the caller donates the input (the data is identical anyway).
        input_output_aliases={0: 0},
        compiler_params=pltpu.CompilerParams(
            dimension_semantics=("parallel",),   # 2-TC sharding on v7x
            vmem_limit_bytes=48 * 1024 * 1024,   # <64 MiB v7x physical; ample elsewhere
        ),
        cost_estimate=pl.CostEstimate(
            flops=0,
            transcendentals=0,
            bytes_accessed=2 * total * itemsize,
        ),
    )(slab)

    # Contiguous row-major reshape == torch .view — metadata-only, free.
    return flat.reshape(bs, n // 4, 2, 2)


if __name__ == "__main__":
    key = jax.random.PRNGKey(0)
    bs, n = 2, 32  # n // 4 = 8  ->  output (2, 8, 2, 2)
    x = jax.random.normal(key, (bs, n), dtype=jnp.float32)

    # Reference (== torch .view) computed up-front, before the aliased call.
    ref = jax.block_until_ready(jnp.reshape(x, (bs, n // 4, 2, 2)))

    out = restructure(x)
    out = jax.block_until_ready(out)

    assert out.shape == (bs, n // 4, 2, 2), out.shape
    assert out.dtype == x.dtype
    assert bool(jnp.array_equal(out, ref))

    print("KERNEL_OK")
</pallas_src>

<mosaic_0001>
module attributes {stable_mosaic.version = 11 : i64} {
  func.func @_copy_kernel(%arg0: i32, %arg1: memref<2x32xf32, #tpu.memory_space<vmem>>, %arg2: memref<2x32xf32, #tpu.memory_space<vmem>>) attributes {dimension_semantics = [#tpu.dimension_semantics<parallel>], iteration_bounds = array<i64: 1>, scalar_prefetch = 0 : i64, scratch_operands = 0 : i64, tpu.core_type = #tpu.core_type<tc>, window_params = [{transform_indices = @transform_0, window_bounds = array<i64: 2, 32>}, {transform_indices = @transform_1, window_bounds = array<i64: 2, 32>}]} {
    %c0 = arith.constant 0 : index
    %c0_0 = arith.constant 0 : index
    %0 = vector.load %arg1[%c0, %c0_0] : memref<2x32xf32, #tpu.memory_space<vmem>>, vector<2x32xf32>
    %c0_1 = arith.constant 0 : index
    %c0_2 = arith.constant 0 : index
    %1 = vector.load %arg2[%c0_1, %c0_2] : memref<2x32xf32, #tpu.memory_space<vmem>>, vector<2x32xf32>
    tpu.vector_store %arg2[%c0_1, %c0_2], %0 {strides = array<i32>} : memref<2x32xf32, #tpu.memory_space<vmem>>, vector<2x32xf32>,
    return
  }
  func.func @transform_0(%arg0: i32) -> (i32, i32) {
    %c0_i32 = arith.constant 0 : i32
    %c0_i32_0 = arith.constant 0 : i32
    return %arg0, %c0_i32 : i32, i32
  }
  func.func @transform_1(%arg0: i32) -> (i32, i32) {
    %c0_i32 = arith.constant 0 : i32
    %c0_i32_0 = arith.constant 0 : i32
    return %arg0, %c0_i32 : i32, i32
  }
}

</mosaic_0001>

<llo_original>
// kernel: tpu_custom_call.1
$region0: #{tpu_custom_call.1}
  #allocation0 [shape = 'u32[]', space=smem, size = 0x4, offset = 0x4, fixed_abs, tag = 'smem constant byte address 0x4 - core index']
  #allocation1 [shape = 'u32[144,128]{1,0:T(1,128)}', space=vmem, size = 0x12000, scoped, tag = 'internal scratch']
  %s0 = inlined_call_operand.hbm [shape: f32[2,32], index: 0, kind: input, shape index: {}, may-alias: {0,1}]
  %s1 = inlined_call_operand.hbm [shape: f32[2,32], index: 1, kind: output, shape index: {}, may-alias: {0,1}]
  %s2 = sld [smem:[#allocation0]]
  $region18: #{tpu_custom_call.1} parent=0
    _
  %s4 = ssub.s32 1, %s2
  %s5 = scalar_select 0, %s4, %s2
  $region1: #{tpu_custom_call.1} parent=0
    #allocation2 [shape = 'u8[1024]{0}', space=vmem, size = 0x400, scoped, tag = 'input window, operand 0, single buffered']
    #allocation3 [shape = 's32[1]{0}', space=sflag, size = 0x4, scoped, tag = 'scoped memory for tpu_custom_call.1']
    #allocation4 [shape = 's32[1]{0}', space=sflag, size = 0x4, scoped, tag = 'scoped memory for tpu_custom_call.1']
    #allocation5 [shape = 'u8[1024]{0}', space=vmem, size = 0x400, scoped, tag = 'output window, operand 0, single buffered']
    %6 = vsyncpa [#allocation3], 0
    %7 = vsyncpa [#allocation4], 0
    // Predicated region
    $region2: #{tpu_custom_call.1} parent=1 // pred_check
      _
    $region3: #{tpu_custom_call.1} parent=1 // pred_check_branch
      %9 = sbr.rel (0) target = $region5
    $region4: #{tpu_custom_call.1} parent=1 // pred_region
      %s11 = ssub.s32 32, 32
      %12 = vsyncadd [#allocation3], %s11
      %s14 = sshll.u32 [#allocation2], 4
      %s15 = int_to_ptr.vmem [resolvable:$true] %s14
      %17 = dma.hbm_to_vmem [thread:$0]  %s0, 32, %s15, [#allocation3]
    $region5: #{tpu_custom_call.1} parent=1 // pred_fallthru
      _
    // Predicated region
    $region6: #{tpu_custom_call.1} parent=1 // pred_check
      _
    $region7: #{tpu_custom_call.1} parent=1 // pred_check_branch
      %19 = sbr.rel (0) target = $region9
    $region8: #{tpu_custom_call.1} parent=1 // pred_region
      %20 = dma.done [#allocation3], 32
    $region9: #{tpu_custom_call.1} parent=1 // pred_fallthru
      _
    %v21 = vld [vmem:[#allocation2] sm:$0x3]
    %vm22 = vcmask 254976
    %23 = vst.msk [vmem:[#allocation5] sm:$0x3] %vm22, %v21
    // Predicated region
    $region10: #{tpu_custom_call.1} parent=1 // pred_check
      _
    $region11: #{tpu_custom_call.1} parent=1 // pred_check_branch
      %25 = sbr.rel (0) target = $region13
    $region12: #{tpu_custom_call.1} parent=1 // pred_region
      %s27 = ssub.s32 32, 32
      %28 = vsyncadd [#allocation4], %s27
      %s30 = sshll.u32 [#allocation5], 4
      %s31 = int_to_ptr.vmem [resolvable:$true] %s30
      %33 = dma.vmem_to_hbm [thread:$0]  %s31, 32, %s1, [#allocation4]
    $region13: #{tpu_custom_call.1} parent=1 // pred_fallthru
      _
    // Predicated region
    $region14: #{tpu_custom_call.1} parent=1 // pred_check
      _
    $region15: #{tpu_custom_call.1} parent=1 // pred_check_branch
      %35 = sbr.rel (0) target = $region17
    $region16: #{tpu_custom_call.1} parent=1 // pred_region
      %36 = dma.done [#allocation4], 32
    $region17: #{tpu_custom_call.1} parent=1 // pred_fallthru
      _
    %37 = vsyncpa [#allocation3], 1
    %38 = vsyncpa [#allocation4], 1

</llo_original>
